<compile_context>
chip_gen: v7x
topology: tpu7x:2x2x1
jax: 0.10.0
libtpu: 0.0.40
codegen_flags: <defaults>
</compile_context>

<pallas_src>
import random

import jax
import jax.numpy as jnp
from jax.experimental import pallas as pl
from jax.experimental.pallas import tpu as pltpu


# ---------------------------------------------------------------------------
# Kernels
# ---------------------------------------------------------------------------

def _transpose_block_kernel(x_ref, o_ref):
    # x_ref block: (Nt, H, W) -> o_ref block: (Nt, W, H)
    # Batched last-two-dim transpose; goes through the XLU (free slack in a
    # memory-bound kernel).
    o_ref[...] = jnp.swapaxes(x_ref[...], -2, -1)


def _transpose_tile_kernel(x_ref, o_ref):
    # Leading (b*c) dim is Squeezed out of the block, so this is a clean 2-D
    # tile transpose: x_ref (th, tw) -> o_ref (tw, th).
    o_ref[...] = x_ref[...].T


# ---------------------------------------------------------------------------
# Wrapper
# ---------------------------------------------------------------------------

def _pick_lane_tile(dim: int) -> int:
    """Largest of {512, 256, 128} that divides `dim`; else full extent."""
    for t in (512, 256, 128):
        if dim % t == 0:
            return t
    return dim  # full extent is always a legal block size


def transpose_last_two(x: jax.Array, *, block_budget_bytes: int = 4 << 20) -> jax.Array:
    """Pallas kernel computing jnp.swapaxes(x, -2, -1) for a 4-D NCHW array.

    block_budget_bytes caps the per-block VMEM footprint (input side); with
    double-buffered input + output tiles the working set is ~4x that, which at
    the 4 MiB default stays within every generation's scoped VMEM limit.
    """
    B, C, H, W = x.shape
    N = B * C
    itemsize = jnp.dtype(x.dtype).itemsize
    # Reshape of the leading (contiguous) dims is free; no data movement.
    xf = x.reshape(N, H, W)

    slice_bytes = H * W * itemsize

    if slice_bytes <= block_budget_bytes:
        # ------- Path A: fold many (b, c) slices into one block -----------
        nt = max(1, min(N, block_budget_bytes // max(slice_bytes, 1)))
        while N % nt != 0:          # largest divisor of N not exceeding budget
            nt -= 1
        out = pl.pallas_call(
            _transpose_block_kernel,
            out_shape=jax.ShapeDtypeStruct((N, W, H), x.dtype),
            grid_spec=pltpu.PrefetchScalarGridSpec(
                num_scalar_prefetch=0,
                grid=(N // nt,),
                in_specs=[pl.BlockSpec((nt, H, W), lambda n: (n, 0, 0))],
                out_specs=pl.BlockSpec((nt, W, H), lambda n: (n, 0, 0)),
            ),
            compiler_params=pltpu.CompilerParams(
                dimension_semantics=("parallel",)),
        )(xf)
    else:
        # ------- Path B: large spatial dims; tile H and W ------------------
        # Lane-aligned (multiple-of-128) tiles keep both in/out tiles
        # vreg-aligned so the transpose stays a clean vxpose and output stores
        # are unmasked.  The output index_map swaps the (h, w) block indices.
        th = _pick_lane_tile(H)
        tw = _pick_lane_tile(W)
        out = pl.pallas_call(
            _transpose_tile_kernel,
            out_shape=jax.ShapeDtypeStruct((N, W, H), x.dtype),
            grid_spec=pltpu.PrefetchScalarGridSpec(
                num_scalar_prefetch=0,
                grid=(N, H // th, W // tw),
                in_specs=[pl.BlockSpec((None, th, tw),
                                       lambda n, h, w: (n, h, w))],
                out_specs=pl.BlockSpec((None, tw, th),
                                       lambda n, h, w: (n, w, h)),
            ),
            compiler_params=pltpu.CompilerParams(
                dimension_semantics=("parallel", "parallel", "parallel")),
        )(xf)

    return out.reshape(B, C, W, H)


# ---------------------------------------------------------------------------
# Module
# ---------------------------------------------------------------------------

class RandomTranspose:
    """JAX/Pallas port of the PyTorch RandomTranspose module.

    No learnable parameters; `self._params` is just the cached random draw
    (exactly as in the reference).  The branch decision is host-side because
    it changes the output *shape* when H != W.
    """

    def __init__(self, p):
        self.p = p
        self._params = 0

    def forward(self, x, params=None):
        if params is None:
            # Host-side draw (mirrors `random.random()` in the spec); avoids
            # any device->host sync on the hot path.
            p = random.random()
            self._params = p
        else:
            # Spec behaviour: replay the stored draw (the passed `params` is
            # intentionally not read, matching the PyTorch reference).
            p = self._params
        if p > 0.5:
            return transpose_last_two(x)
        else:
            # Identity branch: return x unchanged (no copy kernel, no HBM
            # round trip) — same as the PyTorch module returning `x`.
            return x

    __call__ = forward


# ---------------------------------------------------------------------------
# Demo / self-check
# ---------------------------------------------------------------------------

if __name__ == "__main__":
    random.seed(0)
    key = jax.random.PRNGKey(0)
    x = jax.random.normal(key, (2, 4, 16, 16), dtype=jnp.float32)

    module = RandomTranspose(p=0.5)
    out = jax.block_until_ready(module(x))

    ref_t = jnp.swapaxes(x, -2, -1)
    expected = ref_t if module._params > 0.5 else x
    assert out.shape == expected.shape and jnp.allclose(out, expected), \
        "module output mismatch"

    # Path A: whole (H, W) slices folded into one large block.
    y = jax.block_until_ready(transpose_last_two(x))
    assert jnp.allclose(y, ref_t), "transpose kernel (path A) mismatch"

    # Path B: force H/W tiling with a tiny budget to exercise the swapped
    # block index_map on lane-aligned tiles.
    x2 = jax.random.normal(jax.random.PRNGKey(1), (1, 1, 256, 384),
                           dtype=jnp.float32)
    y2 = jax.block_until_ready(
        transpose_last_two(x2, block_budget_bytes=64 * 1024))
    assert jnp.allclose(y2, jnp.swapaxes(x2, -2, -1)), \
        "transpose kernel (path B) mismatch"

    print("KERNEL_OK")
</pallas_src>

<mosaic_0001>
module attributes {stable_mosaic.version = 11 : i64} {
  func.func @_transpose_block_kernel(%arg0: i32, %arg1: memref<8x16x16xf32, #tpu.memory_space<vmem>>, %arg2: memref<8x16x16xf32, #tpu.memory_space<vmem>>) attributes {dimension_semantics = [#tpu.dimension_semantics<parallel>], iteration_bounds = array<i64: 1>, scalar_prefetch = 0 : i64, scratch_operands = 0 : i64, tpu.core_type = #tpu.core_type<tc>, window_params = [{transform_indices = @transform_0, window_bounds = array<i64: 8, 16, 16>}, {transform_indices = @transform_1, window_bounds = array<i64: 8, 16, 16>}]} {
    %c0 = arith.constant 0 : index
    %c0_0 = arith.constant 0 : index
    %c0_1 = arith.constant 0 : index
    %0 = vector.load %arg1[%c0, %c0_0, %c0_1] : memref<8x16x16xf32, #tpu.memory_space<vmem>>, vector<8x16x16xf32>
    %1 = tpu.transpose %0, [0, 2, 1] : vector<8x16x16xf32> -> vector<8x16x16xf32>
    %c0_2 = arith.constant 0 : index
    %c0_3 = arith.constant 0 : index
    %c0_4 = arith.constant 0 : index
    %2 = vector.load %arg2[%c0_2, %c0_3, %c0_4] : memref<8x16x16xf32, #tpu.memory_space<vmem>>, vector<8x16x16xf32>
    tpu.vector_store %arg2[%c0_2, %c0_3, %c0_4], %1 {strides = array<i32>} : memref<8x16x16xf32, #tpu.memory_space<vmem>>, vector<8x16x16xf32>,
    return
  }
  func.func @transform_0(%arg0: i32) -> (i32, i32, i32) {
    %c0_i32 = arith.constant 0 : i32
    %c0_i32_0 = arith.constant 0 : i32
    %c0_i32_1 = arith.constant 0 : i32
    return %arg0, %c0_i32, %c0_i32_0 : i32, i32, i32
  }
  func.func @transform_1(%arg0: i32) -> (i32, i32, i32) {
    %c0_i32 = arith.constant 0 : i32
    %c0_i32_0 = arith.constant 0 : i32
    %c0_i32_1 = arith.constant 0 : i32
    return %arg0, %c0_i32, %c0_i32_0 : i32, i32, i32
  }
}

</mosaic_0001>

<llo_original>
// kernel: tpu_custom_call.1
$region0: #{tpu_custom_call.1}
  #allocation0 [shape = 'u32[]', space=smem, size = 0x4, offset = 0x4, fixed_abs, tag = 'smem constant byte address 0x4 - core index']
  #allocation1 [shape = 'u32[144,128]{1,0:T(1,128)}', space=vmem, size = 0x12000, scoped, tag = 'internal scratch']
  %s0 = inlined_call_operand.hbm [shape: f32[8,16,16], index: 0, kind: input, shape index: {}]
  %s1 = inlined_call_operand.hbm [shape: f32[8,16,16], index: 1, kind: output, shape index: {}]
  %s2 = sld [smem:[#allocation0]]
  $region18: #{tpu_custom_call.1} parent=0
    _
  %s4 = ssub.s32 1, %s2
  %s5 = scalar_select 0, %s4, %s2
  $region1: #{tpu_custom_call.1} parent=0
    #allocation2 [shape = 'u8[65536]{0}', space=vmem, size = 0x10000, scoped, tag = 'input window, operand 0, single buffered']
    #allocation3 [shape = 's32[1]{0}', space=sflag, size = 0x4, scoped, tag = 'scoped memory for tpu_custom_call.1']
    #allocation4 [shape = 's32[1]{0}', space=sflag, size = 0x4, scoped, tag = 'scoped memory for tpu_custom_call.1']
    #allocation5 [shape = 'u8[65536]{0}', space=vmem, size = 0x10000, scoped, tag = 'output window, operand 0, single buffered']
    %6 = vsyncpa [#allocation3], 0
    %7 = vsyncpa [#allocation4], 0
    // Predicated region
    $region2: #{tpu_custom_call.1} parent=1 // pred_check
      _
    $region3: #{tpu_custom_call.1} parent=1 // pred_check_branch
      %9 = sbr.rel (0) target = $region5
    $region4: #{tpu_custom_call.1} parent=1 // pred_region
      %s11 = ssub.s32 2048, 2048
      %12 = vsyncadd [#allocation3], %s11
      %s13 = sshll.u32 [#allocation2], 4
      %s14 = int_to_ptr.vmem [resolvable:$true] %s13
      %19 = dma.hbm_to_vmem [thread:$0]  %s0, 2048, %s14, [#allocation3], 128, 128, 8
    $region5: #{tpu_custom_call.1} parent=1 // pred_fallthru
      _
    // Predicated region
    $region6: #{tpu_custom_call.1} parent=1 // pred_check
      _
    $region7: #{tpu_custom_call.1} parent=1 // pred_check_branch
      %21 = sbr.rel (0) target = $region9
    $region8: #{tpu_custom_call.1} parent=1 // pred_region
      %22 = dma.done [#allocation3], 2048
    $region9: #{tpu_custom_call.1} parent=1 // pred_fallthru
      _
    %v23 = vld [vmem:[#allocation2] sm:$0xff]
    %v24 = vld [vmem:[#allocation2 + $0x8] sm:$0xff]
    %v25 = vld [vmem:[#allocation2 + $0x10] sm:$0xff]
    %v26 = vld [vmem:[#allocation2 + $0x18] sm:$0xff]
    %v27 = vld [vmem:[#allocation2 + $0x20] sm:$0xff]
    %v28 = vld [vmem:[#allocation2 + $0x28] sm:$0xff]
    %v29 = vld [vmem:[#allocation2 + $0x30] sm:$0xff]
    %v30 = vld [vmem:[#allocation2 + $0x38] sm:$0xff]
    %v31 = vld [vmem:[#allocation2 + $0x40] sm:$0xff]
    %v32 = vld [vmem:[#allocation2 + $0x48] sm:$0xff]
    %v33 = vld [vmem:[#allocation2 + $0x50] sm:$0xff]
    %v34 = vld [vmem:[#allocation2 + $0x58] sm:$0xff]
    %v35 = vld [vmem:[#allocation2 + $0x60] sm:$0xff]
    %v36 = vld [vmem:[#allocation2 + $0x68] sm:$0xff]
    %v37 = vld [vmem:[#allocation2 + $0x70] sm:$0xff]
    %v38 = vld [vmem:[#allocation2 + $0x78] sm:$0xff]
    %39 = vxpose.xlu0.b32.start [1/16] %v23, 128
    %40 = vxpose.xlu0.b32.cont [2/16] %v24, 128
    %41 = vxpose.xlu0.b32.cont [3/16] 0.0, 128
    %42 = vxpose.xlu0.b32.cont [4/16] 0.0, 128
    %43 = vxpose.xlu0.b32.cont [5/16] 0.0, 128
    %44 = vxpose.xlu0.b32.cont [6/16] 0.0, 128
    %45 = vxpose.xlu0.b32.cont [7/16] 0.0, 128
    %46 = vxpose.xlu0.b32.cont [8/16] 0.0, 128
    %47 = vxpose.xlu0.b32.cont [9/16] 0.0, 128
    %48 = vxpose.xlu0.b32.cont [10/16] 0.0, 128
    %49 = vxpose.xlu0.b32.cont [11/16] 0.0, 128
    %50 = vxpose.xlu0.b32.cont [12/16] 0.0, 128
    %51 = vxpose.xlu0.b32.cont [13/16] 0.0, 128
    %52 = vxpose.xlu0.b32.cont [14/16] 0.0, 128
    %53 = vxpose.xlu0.b32.cont [15/16] 0.0, 128
    %54 = vxpose.xlu0.b32.end [16/16] 0.0, 128
    %v55 = vpop.trf.xlu0
    %v56 = vpop.trf.xlu0
    %v57 = vpop.trf.xlu0
    %v58 = vpop.trf.xlu0
    %v59 = vpop.trf.xlu0
    %v60 = vpop.trf.xlu0
    %v61 = vpop.trf.xlu0
    %v62 = vpop.trf.xlu0
    %v63 = vpop.trf.xlu0
    %v64 = vpop.trf.xlu0
    %v65 = vpop.trf.xlu0
    %v66 = vpop.trf.xlu0
    %v67 = vpop.trf.xlu0
    %v68 = vpop.trf.xlu0
    %v69 = vpop.trf.xlu0
    %v70 = vpop.trf.xlu0
    %71 = vxpose.xlu0.b32.start [1/16] %v25, 128
    %72 = vxpose.xlu0.b32.cont [2/16] %v26, 128
    %73 = vxpose.xlu0.b32.cont [3/16] 0.0, 128
    %74 = vxpose.xlu0.b32.cont [4/16] 0.0, 128
    %75 = vxpose.xlu0.b32.cont [5/16] 0.0, 128
    %76 = vxpose.xlu0.b32.cont [6/16] 0.0, 128
    %77 = vxpose.xlu0.b32.cont [7/16] 0.0, 128
    %78 = vxpose.xlu0.b32.cont [8/16] 0.0, 128
    %79 = vxpose.xlu0.b32.cont [9/16] 0.0, 128
    %80 = vxpose.xlu0.b32.cont [10/16] 0.0, 128
    %81 = vxpose.xlu0.b32.cont [11/16] 0.0, 128
    %82 = vxpose.xlu0.b32.cont [12/16] 0.0, 128
    %83 = vxpose.xlu0.b32.cont [13/16] 0.0, 128
    %84 = vxpose.xlu0.b32.cont [14/16] 0.0, 128
    %85 = vxpose.xlu0.b32.cont [15/16] 0.0, 128
    %86 = vxpose.xlu0.b32.end [16/16] 0.0, 128
    %v87 = vpop.trf.xlu0
    %v88 = vpop.trf.xlu0
    %v89 = vpop.trf.xlu0
    %v90 = vpop.trf.xlu0
    %v91 = vpop.trf.xlu0
    %v92 = vpop.trf.xlu0
    %v93 = vpop.trf.xlu0
    %v94 = vpop.trf.xlu0
    %v95 = vpop.trf.xlu0
    %v96 = vpop.trf.xlu0
    %v97 = vpop.trf.xlu0
    %v98 = vpop.trf.xlu0
    %v99 = vpop.trf.xlu0
    %v100 = vpop.trf.xlu0
    %v101 = vpop.trf.xlu0
    %v102 = vpop.trf.xlu0
    %103 = vxpose.xlu0.b32.start [1/16] %v27, 128
    %104 = vxpose.xlu0.b32.cont [2/16] %v28, 128
    %105 = vxpose.xlu0.b32.cont [3/16] 0.0, 128
    %106 = vxpose.xlu0.b32.cont [4/16] 0.0, 128
    %107 = vxpose.xlu0.b32.cont [5/16] 0.0, 128
    %108 = vxpose.xlu0.b32.cont [6/16] 0.0, 128
    %109 = vxpose.xlu0.b32.cont [7/16] 0.0, 128
    %110 = vxpose.xlu0.b32.cont [8/16] 0.0, 128
    %111 = vxpose.xlu0.b32.cont [9/16] 0.0, 128
    %112 = vxpose.xlu0.b32.cont [10/16] 0.0, 128
    %113 = vxpose.xlu0.b32.cont [11/16] 0.0, 128
    %114 = vxpose.xlu0.b32.cont [12/16] 0.0, 128
    %115 = vxpose.xlu0.b32.cont [13/16] 0.0, 128
    %116 = vxpose.xlu0.b32.cont [14/16] 0.0, 128
    %117 = vxpose.xlu0.b32.cont [15/16] 0.0, 128
    %118 = vxpose.xlu0.b32.end [16/16] 0.0, 128
    %v119 = vpop.trf.xlu0
    %v120 = vpop.trf.xlu0
    %v121 = vpop.trf.xlu0
    %v122 = vpop.trf.xlu0
    %v123 = vpop.trf.xlu0
    %v124 = vpop.trf.xlu0
    %v125 = vpop.trf.xlu0
    %v126 = vpop.trf.xlu0
    %v127 = vpop.trf.xlu0
    %v128 = vpop.trf.xlu0
    %v129 = vpop.trf.xlu0
    %v130 = vpop.trf.xlu0
    %v131 = vpop.trf.xlu0
    %v132 = vpop.trf.xlu0
    %v133 = vpop.trf.xlu0
    %v134 = vpop.trf.xlu0
    %135 = vxpose.xlu0.b32.start [1/16] %v29, 128
    %136 = vxpose.xlu0.b32.cont [2/16] %v30, 128
    %137 = vxpose.xlu0.b32.cont [3/16] 0.0, 128
    %138 = vxpose.xlu0.b32.cont [4/16] 0.0, 128
    %139 = vxpose.xlu0.b32.cont [5/16] 0.0, 128
    %140 = vxpose.xlu0.b32.cont [6/16] 0.0, 128
    %141 = vxpose.xlu0.b32.cont [7/16] 0.0, 128
    %142 = vxpose.xlu0.b32.cont [8/16] 0.0, 128
    %143 = vxpose.xlu0.b32.cont [9/16] 0.0, 128
    %144 = vxpose.xlu0.b32.cont [10/16] 0.0, 128
    %145 = vxpose.xlu0.b32.cont [11/16] 0.0, 128
    %146 = vxpose.xlu0.b32.cont [12/16] 0.0, 128
    %147 = vxpose.xlu0.b32.cont [13/16] 0.0, 128
    %148 = vxpose.xlu0.b32.cont [14/16] 0.0, 128
    %149 = vxpose.xlu0.b32.cont [15/16] 0.0, 128
    %150 = vxpose.xlu0.b32.end [16/16] 0.0, 128
    %v151 = vpop.trf.xlu0
    %v152 = vpop.trf.xlu0
    %v153 = vpop.trf.xlu0
    %v154 = vpop.trf.xlu0
    %v155 = vpop.trf.xlu0
    %v156 = vpop.trf.xlu0
    %v157 = vpop.trf.xlu0
    %v158 = vpop.trf.xlu0
    %v159 = vpop.trf.xlu0
    %v160 = vpop.trf.xlu0
    %v161 = vpop.trf.xlu0
    %v162 = vpop.trf.xlu0
    %v163 = vpop.trf.xlu0
    %v164 = vpop.trf.xlu0
    %v165 = vpop.trf.xlu0
    %v166 = vpop.trf.xlu0
    %167 = vxpose.xlu0.b32.start [1/16] %v31, 128
    %168 = vxpose.xlu0.b32.cont [2/16] %v32, 128
    %169 = vxpose.xlu0.b32.cont [3/16] 0.0, 128
    %170 = vxpose.xlu0.b32.cont [4/16] 0.0, 128
    %171 = vxpose.xlu0.b32.cont [5/16] 0.0, 128
    %172 = vxpose.xlu0.b32.cont [6/16] 0.0, 128
    %173 = vxpose.xlu0.b32.cont [7/16] 0.0, 128
    %174 = vxpose.xlu0.b32.cont [8/16] 0.0, 128
    %175 = vxpose.xlu0.b32.cont [9/16] 0.0, 128
    %176 = vxpose.xlu0.b32.cont [10/16] 0.0, 128
    %177 = vxpose.xlu0.b32.cont [11/16] 0.0, 128
    %178 = vxpose.xlu0.b32.cont [12/16] 0.0, 128
    %179 = vxpose.xlu0.b32.cont [13/16] 0.0, 128
    %180 = vxpose.xlu0.b32.cont [14/16] 0.0, 128
    %181 = vxpose.xlu0.b32.cont [15/16] 0.0, 128
    %182 = vxpose.xlu0.b32.end [16/16] 0.0, 128
    %v183 = vpop.trf.xlu0
    %v184 = vpop.trf.xlu0
    %v185 = vpop.trf.xlu0
    %v186 = vpop.trf.xlu0
    %v187 = vpop.trf.xlu0
    %v188 = vpop.trf.xlu0
    %v189 = vpop.trf.xlu0
    %v190 = vpop.trf.xlu0
    %v191 = vpop.trf.xlu0
    %v192 = vpop.trf.xlu0
    %v193 = vpop.trf.xlu0
    %v194 = vpop.trf.xlu0
    %v195 = vpop.trf.xlu0
    %v196 = vpop.trf.xlu0
    %v197 = vpop.trf.xlu0
    %v198 = vpop.trf.xlu0
    %199 = vxpose.xlu0.b32.start [1/16] %v33, 128
    %200 = vxpose.xlu0.b32.cont [2/16] %v34, 128
    %201 = vxpose.xlu0.b32.cont [3/16] 0.0, 128
    %202 = vxpose.xlu0.b32.cont [4/16] 0.0, 128
    %203 = vxpose.xlu0.b32.cont [5/16] 0.0, 128
    %204 = vxpose.xlu0.b32.cont [6/16] 0.0, 128
    %205 = vxpose.xlu0.b32.cont [7/16] 0.0, 128
    %206 = vxpose.xlu0.b32.cont [8/16] 0.0, 128
    %207 = vxpose.xlu0.b32.cont [9/16] 0.0, 128
    %208 = vxpose.xlu0.b32.cont [10/16] 0.0, 128
    %209 = vxpose.xlu0.b32.cont [11/16] 0.0, 128
    %210 = vxpose.xlu0.b32.cont [12/16] 0.0, 128
    %211 = vxpose.xlu0.b32.cont [13/16] 0.0, 128
    %212 = vxpose.xlu0.b32.cont [14/16] 0.0, 128
    %213 = vxpose.xlu0.b32.cont [15/16] 0.0, 128
    %214 = vxpose.xlu0.b32.end [16/16] 0.0, 128
    %v215 = vpop.trf.xlu0
    %v216 = vpop.trf.xlu0
    %v217 = vpop.trf.xlu0
    %v218 = vpop.trf.xlu0
    %v219 = vpop.trf.xlu0
    %v220 = vpop.trf.xlu0
    %v221 = vpop.trf.xlu0
    %v222 = vpop.trf.xlu0
    %v223 = vpop.trf.xlu0
    %v224 = vpop.trf.xlu0
    %v225 = vpop.trf.xlu0
    %v226 = vpop.trf.xlu0
    %v227 = vpop.trf.xlu0
    %v228 = vpop.trf.xlu0
    %v229 = vpop.trf.xlu0
    %v230 = vpop.trf.xlu0
    %231 = vxpose.xlu0.b32.start [1/16] %v35, 128
    %232 = vxpose.xlu0.b32.cont [2/16] %v36, 128
    %233 = vxpose.xlu0.b32.cont [3/16] 0.0, 128
    %234 = vxpose.xlu0.b32.cont [4/16] 0.0, 128
    %235 = vxpose.xlu0.b32.cont [5/16] 0.0, 128
    %236 = vxpose.xlu0.b32.cont [6/16] 0.0, 128
    %237 = vxpose.xlu0.b32.cont [7/16] 0.0, 128
    %238 = vxpose.xlu0.b32.cont [8/16] 0.0, 128
    %239 = vxpose.xlu0.b32.cont [9/16] 0.0, 128
    %240 = vxpose.xlu0.b32.cont [10/16] 0.0, 128
    %241 = vxpose.xlu0.b32.cont [11/16] 0.0, 128
    %242 = vxpose.xlu0.b32.cont [12/16] 0.0, 128
    %243 = vxpose.xlu0.b32.cont [13/16] 0.0, 128
    %244 = vxpose.xlu0.b32.cont [14/16] 0.0, 128
    %245 = vxpose.xlu0.b32.cont [15/16] 0.0, 128
    %246 = vxpose.xlu0.b32.end [16/16] 0.0, 128
    %v247 = vpop.trf.xlu0
    %v248 = vpop.trf.xlu0
    %v249 = vpop.trf.xlu0
    %v250 = vpop.trf.xlu0
    %v251 = vpop.trf.xlu0
    %v252 = vpop.trf.xlu0
    %v253 = vpop.trf.xlu0
    %v254 = vpop.trf.xlu0
    %v255 = vpop.trf.xlu0
    %v256 = vpop.trf.xlu0
    %v257 = vpop.trf.xlu0
    %v258 = vpop.trf.xlu0
    %v259 = vpop.trf.xlu0
    %v260 = vpop.trf.xlu0
    %v261 = vpop.trf.xlu0
    %v262 = vpop.trf.xlu0
    %263 = vxpose.xlu0.b32.start [1/16] %v37, 128
    %264 = vxpose.xlu0.b32.cont [2/16] %v38, 128
    %265 = vxpose.xlu0.b32.cont [3/16] 0.0, 128
    %266 = vxpose.xlu0.b32.cont [4/16] 0.0, 128
    %267 = vxpose.xlu0.b32.cont [5/16] 0.0, 128
    %268 = vxpose.xlu0.b32.cont [6/16] 0.0, 128
    %269 = vxpose.xlu0.b32.cont [7/16] 0.0, 128
    %270 = vxpose.xlu0.b32.cont [8/16] 0.0, 128
    %271 = vxpose.xlu0.b32.cont [9/16] 0.0, 128
    %272 = vxpose.xlu0.b32.cont [10/16] 0.0, 128
    %273 = vxpose.xlu0.b32.cont [11/16] 0.0, 128
    %274 = vxpose.xlu0.b32.cont [12/16] 0.0, 128
    %275 = vxpose.xlu0.b32.cont [13/16] 0.0, 128
    %276 = vxpose.xlu0.b32.cont [14/16] 0.0, 128
    %277 = vxpose.xlu0.b32.cont [15/16] 0.0, 128
    %278 = vxpose.xlu0.b32.end [16/16] 0.0, 128
    %v279 = vpop.trf.xlu0
    %v280 = vpop.trf.xlu0
    %v281 = vpop.trf.xlu0
    %v282 = vpop.trf.xlu0
    %v283 = vpop.trf.xlu0
    %v284 = vpop.trf.xlu0
    %v285 = vpop.trf.xlu0
    %v286 = vpop.trf.xlu0
    %v287 = vpop.trf.xlu0
    %v288 = vpop.trf.xlu0
    %v289 = vpop.trf.xlu0
    %v290 = vpop.trf.xlu0
    %v291 = vpop.trf.xlu0
    %v292 = vpop.trf.xlu0
    %v293 = vpop.trf.xlu0
    %v294 = vpop.trf.xlu0
    %vm295 = vcmask 130048
    %296 = vst.msk [vmem:[#allocation5] sm:$0xff] %vm295, %v55
    %297 = vst.msk [vmem:[#allocation5 + $0x8] sm:$0xff] %vm295, %v56
    %298 = vst.msk [vmem:[#allocation5 + $0x10] sm:$0xff] %vm295, %v87
    %299 = vst.msk [vmem:[#allocation5 + $0x18] sm:$0xff] %vm295, %v88
    %300 = vst.msk [vmem:[#allocation5 + $0x20] sm:$0xff] %vm295, %v119
    %301 = vst.msk [vmem:[#allocation5 + $0x28] sm:$0xff] %vm295, %v120
    %302 = vst.msk [vmem:[#allocation5 + $0x30] sm:$0xff] %vm295, %v151
    %303 = vst.msk [vmem:[#allocation5 + $0x38] sm:$0xff] %vm295, %v152
    %304 = vst.msk [vmem:[#allocation5 + $0x40] sm:$0xff] %vm295, %v183
    %305 = vst.msk [vmem:[#allocation5 + $0x48] sm:$0xff] %vm295, %v184
    %306 = vst.msk [vmem:[#allocation5 + $0x50] sm:$0xff] %vm295, %v215
    %307 = vst.msk [vmem:[#allocation5 + $0x58] sm:$0xff] %vm295, %v216
    %308 = vst.msk [vmem:[#allocation5 + $0x60] sm:$0xff] %vm295, %v247
    %309 = vst.msk [vmem:[#allocation5 + $0x68] sm:$0xff] %vm295, %v248
    %310 = vst.msk [vmem:[#allocation5 + $0x70] sm:$0xff] %vm295, %v279
    %311 = vst.msk [vmem:[#allocation5 + $0x78] sm:$0xff] %vm295, %v280
    // Predicated region
    $region10: #{tpu_custom_call.1} parent=1 // pred_check
      _
    $region11: #{tpu_custom_call.1} parent=1 // pred_check_branch
      %313 = sbr.rel (0) target = $region13
    $region12: #{tpu_custom_call.1} parent=1 // pred_region
      %s315 = ssub.s32 2048, 2048
      %316 = vsyncadd [#allocation4], %s315
      %s317 = sshll.u32 [#allocation5], 4
      %s318 = int_to_ptr.vmem [resolvable:$true] %s317
      %323 = dma.vmem_to_hbm [thread:$0]  %s318, 2048, %s1, [#allocation4], 128, 128, 8
    $region13: #{tpu_custom_call.1} parent=1 // pred_fallthru
      _
    // Predicated region
    $region14: #{tpu_custom_call.1} parent=1 // pred_check
      _
    $region15: #{tpu_custom_call.1} parent=1 // pred_check_branch
      %325 = sbr.rel (0) target = $region17
    $region16: #{tpu_custom_call.1} parent=1 // pred_region
      %326 = dma.done [#allocation4], 2048
    $region17: #{tpu_custom_call.1} parent=1 // pred_fallthru
      _
    %327 = vsyncpa [#allocation3], 1
    %328 = vsyncpa [#allocation4], 1

</llo_original>
